<compile_context>
chip_gen: v6e
topology: v6e:2x2x1
jax: 0.10.0
libtpu: 0.0.40
codegen_flags: <defaults>
</compile_context>

<pallas_src>
import jax
import jax.numpy as jnp
from jax.experimental import pallas as pl
from jax.experimental.pallas import tpu as pltpu


DROPOUT_P = 0.5
INITIAL_HIDDEN = 30
HIDDEN_STEP = 10
TILE_ROWS = 128          # rows (MC samples x batch) per grid step; fills MXU M dim
LANE = 128
SUBLANE = 8


def _round_up(x, m):
    return ((x + m - 1) // m) * m


def _layer_sizes(input_size, output_size, num_layers):
    """Replicates the size bookkeeping of RiverNet_MCD.__init__."""
    sizes = []
    in_size = input_size
    hidden = INITIAL_HIDDEN
    for i in range(num_layers - 1):
        sizes.append((in_size, hidden))
        in_size = hidden
        if i < num_layers - 2:
            hidden += HIDDEN_STEP
    last_in = hidden if num_layers > 1 else input_size
    sizes.append((last_in, output_size))
    return sizes


def init_params(key, input_size, output_size, num_layers=2):
    """PyTorch nn.Linear-style init: W (out,in), b (out,), U(-1/sqrt(in), 1/sqrt(in))."""
    params = []
    for fan_in, fan_out in _layer_sizes(input_size, output_size, num_layers):
        key, kw, kb = jax.random.split(key, 3)
        bound = 1.0 / (fan_in ** 0.5)
        w = jax.random.uniform(kw, (fan_out, fan_in), jnp.float32, -bound, bound)
        b = jax.random.uniform(kb, (fan_out,), jnp.float32, -bound, bound)
        params.append((w, b))
    return params


def prepare_params(params):
    """Pad + transpose PyTorch-layout params once, kernel-friendly layout.

    Hidden widths are padded to a multiple of 8 (whole sublanes); the final
    output width is padded to 128 (lane-dense stores).  Pad columns of W/b are
    zero so relu/dropout on them stays zero and padded output lanes are exact
    zeros (sliced away by the wrapper).
    Returns (prepared, hidden_pads, out_dim):
      prepared   : list of (W_t (in_pad, out_pad), b_row (1, out_pad))
      hidden_pads: padded widths of the intermediate (dropout) activations
      out_dim    : original (unpadded) output width
    """
    n = len(params)
    prepared, hidden_pads = [], []
    in_pad = params[0][0].shape[1]
    for li, (w, b) in enumerate(params):
        out_dim, in_dim = w.shape
        out_pad = _round_up(out_dim, LANE if li == n - 1 else SUBLANE)
        if li < n - 1:
            hidden_pads.append(out_pad)
        w_t = jnp.zeros((in_pad, out_pad), jnp.float32).at[:in_dim, :out_dim].set(w.T)
        b_row = jnp.zeros((1, out_pad), jnp.float32).at[0, :out_dim].set(b)
        prepared.append((w_t, b_row))
        in_pad = out_pad
    return prepared, hidden_pads, params[-1][0].shape[0]


def _make_kernel(num_linear, use_masks):
    """Fused MLP kernel: (num_linear-1) x [Linear, ReLU, Dropout-mask] + Linear."""
    n_masks = num_linear - 1 if use_masks else 0

    def kernel(*refs):
        # refs = x, mask_1..mask_{n_masks}, w1, b1, ..., w_n, b_n, out
        x_ref = refs[0]
        mask_refs = refs[1:1 + n_masks]
        wb = refs[1 + n_masks:-1]
        out_ref = refs[-1]

        h = x_ref[...]
        for li in range(num_linear):
            w = wb[2 * li][...]
            b = wb[2 * li + 1][...]
            h = jnp.dot(h, w, preferred_element_type=jnp.float32) + b
            if li < num_linear - 1:
                h = jnp.maximum(h, 0.0)                 # ReLU
                if use_masks:
                    h = h * mask_refs[li][...]          # dropout: mask in {0, 1/(1-p)}
        out_ref[...] = h.astype(out_ref.dtype)

    return kernel


def rivernet_mcd_forward(x, prepared, hidden_pads, out_dim, key=None, *,
                         num_samples=1, training=True, tile_rows=TILE_ROWS):
    """Runs `num_samples` stochastic forward passes (MC dropout) in one fused
    pallas_call.  Returns (num_samples, B, out_dim) float32.

    x: (B, input_size) f32.  prepared/hidden_pads/out_dim from prepare_params().
    """
    B, in_dim = x.shape
    num_linear = len(prepared)
    out_pad = prepared[-1][0].shape[1]

    # Stack MC samples along the row axis so the MXU M dimension is filled,
    # then pad rows to a whole number of tiles.
    rows = B * num_samples
    rows_pad = _round_up(rows, tile_rows)
    xs = jnp.broadcast_to(x[None], (num_samples, B, in_dim)).reshape(rows, in_dim)
    if rows_pad != rows:
        xs = jnp.pad(xs, ((0, rows_pad - rows), (0, 0)))

    use_masks = bool(training) and num_linear > 1
    # TODO(synk): masks use jax.random, deterministic per key but not
    # bit-identical to torch.nn.Dropout's RNG stream.
    masks = []
    if use_masks:
        assert key is not None, "training=True requires a PRNG key"
        for h_pad in hidden_pads:
            key, sub = jax.random.split(key)
            keep = jax.random.bernoulli(sub, 1.0 - DROPOUT_P, (rows_pad, h_pad))
            masks.append(keep.astype(jnp.float32) * (1.0 / (1.0 - DROPOUT_P)))

    grid = (rows_pad // tile_rows,)

    in_specs = [pl.BlockSpec((tile_rows, in_dim), lambda i: (i, 0))]
    flat_args = [xs]
    for m in masks:
        in_specs.append(pl.BlockSpec((tile_rows, m.shape[1]), lambda i: (i, 0)))
        flat_args.append(m)
    for w_t, b_row in prepared:
        # Weights/biases: same block every step -> stay VMEM-resident.
        in_specs.append(pl.BlockSpec(w_t.shape, lambda i: (0, 0)))
        in_specs.append(pl.BlockSpec(b_row.shape, lambda i: (0, 0)))
        flat_args.append(w_t)
        flat_args.append(b_row)

    # Advisory cost hint for XLA scheduling around the custom call.
    flops = 0
    prev = in_dim
    for w_t, _ in prepared:
        flops += 2 * rows_pad * prev * w_t.shape[1]
        prev = w_t.shape[1]
    bytes_accessed = 4 * (xs.size + sum(m.size for m in masks)
                          + sum(w.size + b.size for w, b in prepared)
                          + rows_pad * out_pad)
    cost = pl.CostEstimate(flops=int(flops), transcendentals=0,
                           bytes_accessed=int(bytes_accessed))

    out = pl.pallas_call(
        _make_kernel(num_linear, use_masks),
        out_shape=jax.ShapeDtypeStruct((rows_pad, out_pad), jnp.float32),
        grid=grid,
        in_specs=in_specs,
        out_specs=pl.BlockSpec((tile_rows, out_pad), lambda i: (i, 0)),
        compiler_params=pltpu.CompilerParams(
            dimension_semantics=("parallel",)),     # megacore-shardable on v7x
        cost_estimate=cost,
    )(*flat_args)

    return out[:rows, :out_dim].reshape(num_samples, B, out_dim)


def rivernet_reference(x, params, *, training=False):
    """Pure-JAX reference (eval mode: dropout is identity)."""
    h = x
    n = len(params)
    for li, (w, b) in enumerate(params):
        h = h @ w.T + b
        if li < n - 1:
            h = jnp.maximum(h, 0.0)
    return h


if __name__ == "__main__":
    key = jax.random.PRNGKey(0)
    key, kx, kp, kp3, kd = jax.random.split(key, 5)

    batch, input_size, output_size = 8, 16, 4

    x = jax.random.normal(kx, (batch, input_size), jnp.float32)

    # ---- num_layers = 2 (the module default) ----
    params = init_params(kp, input_size, output_size, num_layers=2)
    prepared, hidden_pads, out_dim = prepare_params(params)

    # Eval-mode correctness check against the pure-JAX reference.
    y_eval = rivernet_mcd_forward(x, prepared, hidden_pads, out_dim,
                                  num_samples=1, training=False)
    jax.block_until_ready(y_eval)
    y_ref = rivernet_reference(x, params)
    assert y_eval.shape == (1, batch, output_size)
    assert jnp.allclose(y_eval[0], y_ref, atol=1e-5, rtol=1e-5), "eval mismatch"

    # Train-mode MC dropout: 32 stochastic samples fused into one pallas_call
    # (256 rows -> grid=(2,), 128 rows per step).
    num_samples = 32
    y_mc = rivernet_mcd_forward(x, prepared, hidden_pads, out_dim, kd,
                                num_samples=num_samples, training=True)
    jax.block_until_ready(y_mc)
    assert y_mc.shape == (num_samples, batch, output_size)
    assert jnp.all(jnp.isfinite(y_mc))
    # MC samples should differ (different dropout masks per sample).
    assert not jnp.allclose(y_mc[0], y_mc[1]), "MC samples unexpectedly identical"

    # ---- num_layers = 3 (ragged hidden widths 30, 40), eval-mode check ----
    params3 = init_params(kp3, input_size, output_size, num_layers=3)
    prepared3, hidden_pads3, out_dim3 = prepare_params(params3)
    y3 = rivernet_mcd_forward(x, prepared3, hidden_pads3, out_dim3,
                              num_samples=1, training=False)
    jax.block_until_ready(y3)
    y3_ref = rivernet_reference(x, params3)
    assert jnp.allclose(y3[0], y3_ref, atol=1e-5, rtol=1e-5), "3-layer eval mismatch"

    print("KERNEL_OK")
</pallas_src>

<mosaic_0001>
module attributes {stable_mosaic.version = 11 : i64} {
  func.func @kernel(%arg0: i32, %arg1: memref<128x16xf32, #tpu.memory_space<vmem>>, %arg2: memref<16x32xf32, #tpu.memory_space<vmem>>, %arg3: memref<1x32xf32, #tpu.memory_space<vmem>>, %arg4: memref<32x128xf32, #tpu.memory_space<vmem>>, %arg5: memref<1x128xf32, #tpu.memory_space<vmem>>, %arg6: memref<128x128xf32, #tpu.memory_space<vmem>>) attributes {dimension_semantics = [#tpu.dimension_semantics<parallel>], iteration_bounds = array<i64: 1>, scalar_prefetch = 0 : i64, scratch_operands = 0 : i64, tpu.core_type = #tpu.core_type<tc>, window_params = [{transform_indices = @transform_0, window_bounds = array<i64: 128, 16>}, {pipeline_mode = #tpu.pipeline_mode<synchronous>, transform_indices = @transform_1, window_bounds = array<i64: 16, 32>}, {pipeline_mode = #tpu.pipeline_mode<synchronous>, transform_indices = @transform_2, window_bounds = array<i64: 1, 32>}, {pipeline_mode = #tpu.pipeline_mode<synchronous>, transform_indices = @transform_3, window_bounds = array<i64: 32, 128>}, {pipeline_mode = #tpu.pipeline_mode<synchronous>, transform_indices = @transform_4, window_bounds = array<i64: 1, 128>}, {transform_indices = @transform_5, window_bounds = array<i64: 128, 128>}]} {
    %c0 = arith.constant 0 : index
    %c0_0 = arith.constant 0 : index
    %0 = vector.load %arg1[%c0, %c0_0] : memref<128x16xf32, #tpu.memory_space<vmem>>, vector<128x16xf32>
    %c0_1 = arith.constant 0 : index
    %c0_2 = arith.constant 0 : index
    %1 = vector.load %arg2[%c0_1, %c0_2] : memref<16x32xf32, #tpu.memory_space<vmem>>, vector<16x32xf32>
    %c0_3 = arith.constant 0 : index
    %c0_4 = arith.constant 0 : index
    %2 = vector.load %arg3[%c0_3, %c0_4] : memref<1x32xf32, #tpu.memory_space<vmem>>, vector<1x32xf32>
    %cst = arith.constant dense<0.000000e+00> : vector<128x32xf32>
    %3 = tpu.matmul %0, %1, %cst {dimension_numbers = #tpu.dot_dimension_numbers<[1], [0], [0], [1], [0, 0, 1, 1], [], []>} : vector<128x16xf32>, vector<16x32xf32>, vector<128x32xf32> -> vector<128x32xf32>
    %4 = vector.broadcast %2 : vector<1x32xf32> to vector<128x32xf32>
    %5 = arith.addf %3, %4 : vector<128x32xf32>
    %cst_5 = arith.constant 0.000000e+00 : f32
    %6 = vector.broadcast %cst_5 : f32 to vector<128x32xf32>
    %7 = arith.maximumf %5, %6 : vector<128x32xf32>
    %c0_6 = arith.constant 0 : index
    %c0_7 = arith.constant 0 : index
    %8 = vector.load %arg4[%c0_6, %c0_7] : memref<32x128xf32, #tpu.memory_space<vmem>>, vector<32x128xf32>
    %c0_8 = arith.constant 0 : index
    %c0_9 = arith.constant 0 : index
    %9 = vector.load %arg5[%c0_8, %c0_9] : memref<1x128xf32, #tpu.memory_space<vmem>>, vector<1x128xf32>
    %cst_10 = arith.constant dense<0.000000e+00> : vector<128x128xf32>
    %10 = tpu.matmul %7, %8, %cst_10 {dimension_numbers = #tpu.dot_dimension_numbers<[1], [0], [0], [1], [0, 0, 1, 1], [], []>} : vector<128x32xf32>, vector<32x128xf32>, vector<128x128xf32> -> vector<128x128xf32>
    %11 = vector.broadcast %9 : vector<1x128xf32> to vector<128x128xf32>
    %12 = arith.addf %10, %11 : vector<128x128xf32>
    %c0_11 = arith.constant 0 : index
    %c0_12 = arith.constant 0 : index
    %13 = vector.load %arg6[%c0_11, %c0_12] : memref<128x128xf32, #tpu.memory_space<vmem>>, vector<128x128xf32>
    tpu.vector_store %arg6[%c0_11, %c0_12], %12 {strides = array<i32>} : memref<128x128xf32, #tpu.memory_space<vmem>>, vector<128x128xf32>,
    return
  }
  func.func @transform_0(%arg0: i32) -> (i32, i32) {
    %c0_i32 = arith.constant 0 : i32
    %c0_i32_0 = arith.constant 0 : i32
    return %arg0, %c0_i32 : i32, i32
  }
  func.func @transform_1(%arg0: i32) -> (i32, i32) {
    %c0_i32 = arith.constant 0 : i32
    %c0_i32_0 = arith.constant 0 : i32
    %c0_i32_1 = arith.constant 0 : i32
    return %c0_i32, %c0_i32_0 : i32, i32
  }
  func.func @transform_2(%arg0: i32) -> (i32, i32) {
    %c0_i32 = arith.constant 0 : i32
    %c0_i32_0 = arith.constant 0 : i32
    %c0_i32_1 = arith.constant 0 : i32
    return %c0_i32, %c0_i32_0 : i32, i32
  }
  func.func @transform_3(%arg0: i32) -> (i32, i32) {
    %c0_i32 = arith.constant 0 : i32
    %c0_i32_0 = arith.constant 0 : i32
    %c0_i32_1 = arith.constant 0 : i32
    return %c0_i32, %c0_i32_0 : i32, i32
  }
  func.func @transform_4(%arg0: i32) -> (i32, i32) {
    %c0_i32 = arith.constant 0 : i32
    %c0_i32_0 = arith.constant 0 : i32
    %c0_i32_1 = arith.constant 0 : i32
    return %c0_i32, %c0_i32_0 : i32, i32
  }
  func.func @transform_5(%arg0: i32) -> (i32, i32) {
    %c0_i32 = arith.constant 0 : i32
    %c0_i32_0 = arith.constant 0 : i32
    return %arg0, %c0_i32 : i32, i32
  }
}

</mosaic_0001>

<llo_original>
// kernel: tpu_custom_call.1
$region0: #{tpu_custom_call.1}
  #allocation0 [shape = 'u32[]', space=smem, size = 0x4, offset = 0x4, fixed_abs, tag = 'smem constant byte address 0x4 - core index']
  #allocation1 [shape = 'u32[144,128]{1,0:T(1,128)}', space=vmem, size = 0x12000, scoped, tag = 'internal scratch']
  %s0 = inlined_call_operand.vmem [shape: f32[128,16], index: 0, kind: input, shape index: {}]
  %s1 = inlined_call_operand.vmem [shape: f32[16,32], index: 1, kind: input, shape index: {}]
  %s2 = inlined_call_operand.vmem [shape: f32[1,32], index: 2, kind: input, shape index: {}]
  %s3 = inlined_call_operand.vmem [shape: f32[32,128], index: 3, kind: input, shape index: {}]
  %s4 = inlined_call_operand.vmem [shape: f32[1,128], index: 4, kind: input, shape index: {}]
  %s5 = inlined_call_operand.hbm [shape: f32[128,128], index: 5, kind: output, shape index: {}]
  %s6 = sld [smem:[#allocation0]]
  $region30: #{tpu_custom_call.1} parent=0
    _
  %s8 = ssub.s32 1, %s6
  %s9 = scalar_select 0, %s8, %s6
  $region1: #{tpu_custom_call.1} parent=0
    #allocation2 [shape = 'u8[65536]{0}', space=vmem, size = 0x10000, scoped, tag = 'output window, operand 0, single buffered']
    #allocation3 [shape = 's32[1]{0}', space=sflag, size = 0x4, scoped, tag = 'scoped memory for tpu_custom_call.1']
    %10 = vsyncpa [#allocation3], 0
    // Predicated region
    $region2: #{tpu_custom_call.1} parent=1 // pred_check
      _
    $region3: #{tpu_custom_call.1} parent=1 // pred_check_branch
      %12 = sbr.rel (0) target = $region5
    $region4: #{tpu_custom_call.1} parent=1 // pred_region
      _
    $region5: #{tpu_custom_call.1} parent=1 // pred_fallthru
      _
    // Predicated region
    $region6: #{tpu_custom_call.1} parent=1 // pred_check
      _
    $region7: #{tpu_custom_call.1} parent=1 // pred_check_branch
      %14 = sbr.rel (0) target = $region9
    $region8: #{tpu_custom_call.1} parent=1 // pred_region
      _
    $region9: #{tpu_custom_call.1} parent=1 // pred_fallthru
      _
    // Predicated region
    $region10: #{tpu_custom_call.1} parent=1 // pred_check
      _
    $region11: #{tpu_custom_call.1} parent=1 // pred_check_branch
      %16 = sbr.rel (0) target = $region13
    $region12: #{tpu_custom_call.1} parent=1 // pred_region
      _
    $region13: #{tpu_custom_call.1} parent=1 // pred_fallthru
      _
    // Predicated region
    $region14: #{tpu_custom_call.1} parent=1 // pred_check
      _
    $region15: #{tpu_custom_call.1} parent=1 // pred_check_branch
      %18 = sbr.rel (0) target = $region17
    $region16: #{tpu_custom_call.1} parent=1 // pred_region
      _
    $region17: #{tpu_custom_call.1} parent=1 // pred_fallthru
      _
    // Predicated region
    $region18: #{tpu_custom_call.1} parent=1 // pred_check
      _
    $region19: #{tpu_custom_call.1} parent=1 // pred_check_branch
      %20 = sbr.rel (0) target = $region21
    $region20: #{tpu_custom_call.1} parent=1 // pred_region
      _
    $region21: #{tpu_custom_call.1} parent=1 // pred_fallthru
      _
    %v21 = vld [vmem:[%s0] sm:$0xff]
    %v22 = vld [vmem:[%s0 + $0x8] sm:$0xff]
    %v23 = vld [vmem:[%s0 + $0x10] sm:$0xff]
    %v24 = vld [vmem:[%s0 + $0x18] sm:$0xff]
    %v25 = vld [vmem:[%s0 + $0x20] sm:$0xff]
    %v26 = vld [vmem:[%s0 + $0x28] sm:$0xff]
    %v27 = vld [vmem:[%s0 + $0x30] sm:$0xff]
    %v28 = vld [vmem:[%s0 + $0x38] sm:$0xff]
    %v29 = vld [vmem:[%s0 + $0x40] sm:$0xff]
    %v30 = vld [vmem:[%s0 + $0x48] sm:$0xff]
    %v31 = vld [vmem:[%s0 + $0x50] sm:$0xff]
    %v32 = vld [vmem:[%s0 + $0x58] sm:$0xff]
    %v33 = vld [vmem:[%s0 + $0x60] sm:$0xff]
    %v34 = vld [vmem:[%s0 + $0x68] sm:$0xff]
    %v35 = vld [vmem:[%s0 + $0x70] sm:$0xff]
    %v36 = vld [vmem:[%s0 + $0x78] sm:$0xff]
    %v37 = vld [vmem:[%s1] sm:$0xff]
    %v38 = vld [vmem:[%s1 + $0x8] sm:$0xff]
    %v39 = vld [vmem:[%s2] sm:$0x1]
    %v41 = vlaneseq
    %v42 = vshrl.u32 %v41, 7
    %v43 = vsub.s32 0, %v42
    %v44 = vrot.slane %v39, %v43
    %vm46 = vcmask 130048
    %v48 = vsel %vm46, %v21, 0
    %v51 = vsel %vm46, %v22, 0
    %v54 = vsel %vm46, %v23, 0
    %v57 = vsel %vm46, %v24, 0
    %v60 = vsel %vm46, %v25, 0
    %v63 = vsel %vm46, %v26, 0
    %v66 = vsel %vm46, %v27, 0
    %v69 = vsel %vm46, %v28, 0
    %v72 = vsel %vm46, %v29, 0
    %v75 = vsel %vm46, %v30, 0
    %v78 = vsel %vm46, %v31, 0
    %v81 = vsel %vm46, %v32, 0
    %v84 = vsel %vm46, %v33, 0
    %v87 = vsel %vm46, %v34, 0
    %v90 = vsel %vm46, %v35, 0
    %v93 = vsel %vm46, %v36, 0
    %95 = vmatprep.subr.mxu0 0.0
    %96 = vmatpush1.msra.mxu0 0.0
    %97 = vmatprep.subr.mxu0 0.0
    %98 = vmatpush1.msra.mxu0 0.0
    %99 = vmatprep.subr.mxu0 0.0
    %100 = vmatpush1.msra.mxu0 0.0
    %101 = vmatprep.subr.mxu0 0.0
    %102 = vmatpush1.msra.mxu0 0.0
    %103 = vmatprep.subr.mxu0 0.0
    %104 = vmatpush1.msra.mxu0 0.0
    %105 = vmatprep.subr.mxu0 0.0
    %106 = vmatpush1.msra.mxu0 0.0
    %107 = vmatprep.subr.mxu0 0.0
    %108 = vmatpush1.msra.mxu0 0.0
    %109 = vmatprep.subr.mxu0 0.0
    %110 = vmatpush1.msra.mxu0 0.0
    %111 = vmatprep.subr.mxu0 0.0
    %112 = vmatpush1.msra.mxu0 0.0
    %113 = vmatprep.subr.mxu0 0.0
    %114 = vmatpush1.msra.mxu0 0.0
    %115 = vmatprep.subr.mxu0 0.0
    %116 = vmatpush1.msra.mxu0 0.0
    %117 = vmatprep.subr.mxu0 0.0
    %118 = vmatpush1.msra.mxu0 0.0
    %119 = vmatprep.subr.mxu0 0.0
    %120 = vmatpush1.msra.mxu0 0.0
    %121 = vmatprep.subr.mxu0 0.0
    %122 = vmatpush1.msra.mxu0 0.0
    %123 = vmatprep.subr.mxu0 0.0
    %124 = vmatpush1.msra.mxu0 %v38
    %125 = vmatprep.subr.mxu0 0.0
    %126 = vmatpush1.msra.mxu0 %v37
    %127 = vmatprep.subr.mxu0 0.0
    %128 = vmatpush2.msra.mxu0 0.0
    %129 = vmatprep.subr.mxu0 0.0
    %130 = vmatpush2.msra.mxu0 0.0
    %131 = vmatprep.subr.mxu0 0.0
    %132 = vmatpush2.msra.mxu0 0.0
    %133 = vmatprep.subr.mxu0 0.0
    %134 = vmatpush2.msra.mxu0 0.0
    %135 = vmatprep.subr.mxu0 0.0
    %136 = vmatpush2.msra.mxu0 0.0
    %137 = vmatprep.subr.mxu0 0.0
    %138 = vmatpush2.msra.mxu0 0.0
    %139 = vmatprep.subr.mxu0 0.0
    %140 = vmatpush2.msra.mxu0 0.0
    %141 = vmatprep.subr.mxu0 0.0
    %142 = vmatpush2.msra.mxu0 0.0
    %143 = vmatprep.subr.mxu0 0.0
    %144 = vmatpush2.msra.mxu0 0.0
    %145 = vmatprep.subr.mxu0 0.0
    %146 = vmatpush2.msra.mxu0 0.0
    %147 = vmatprep.subr.mxu0 0.0
    %148 = vmatpush2.msra.mxu0 0.0
    %149 = vmatprep.subr.mxu0 0.0
    %150 = vmatpush2.msra.mxu0 0.0
    %151 = vmatprep.subr.mxu0 0.0
    %152 = vmatpush2.msra.mxu0 0.0
    %153 = vmatprep.subr.mxu0 0.0
    %154 = vmatpush2.msra.mxu0 0.0
    %155 = vmatprep.subr.mxu0 0.0
    %156 = vmatpush2.msra.mxu0 0.0
    %157 = vmatprep.subr.mxu0 0.0
    %158 = vmatpush2.msra.mxu0 0.0
    %159 = vmatprep.mubr.f32.mxu0 0.0
    %160 = vmatmul.mubr.f32.gmra.mxu0 %v48
    %v161 = vpop.f32.mrf.mxu0
    %v162 = vadd.f32 %v44, %v161
    %v163 = vpop.f32.mrf.mxu0
    %164 = vmatprep.mubr.f32.mxu0 0.0
    %165 = vmatmul.mubr.f32.gmra.mxu0 %v51
    %v166 = vpop.f32.mrf.mxu0
    %v167 = vadd.f32 %v44, %v166
    %v168 = vpop.f32.mrf.mxu0
    %169 = vmatprep.mubr.f32.mxu0 0.0
    %170 = vmatmul.mubr.f32.gmra.mxu0 %v54
    %v171 = vpop.f32.mrf.mxu0
    %v172 = vadd.f32 %v44, %v171
    %v173 = vpop.f32.mrf.mxu0
    %174 = vmatprep.mubr.f32.mxu0 0.0
    %175 = vmatmul.mubr.f32.gmra.mxu0 %v57
    %v176 = vpop.f32.mrf.mxu0
    %v177 = vadd.f32 %v44, %v176
    %v178 = vpop.f32.mrf.mxu0
    %179 = vmatprep.mubr.f32.mxu0 0.0
    %180 = vmatmul.mubr.f32.gmra.mxu0 %v60
    %v181 = vpop.f32.mrf.mxu0
    %v182 = vadd.f32 %v44, %v181
    %v183 = vpop.f32.mrf.mxu0
    %184 = vmatprep.mubr.f32.mxu0 0.0
    %185 = vmatmul.mubr.f32.gmra.mxu0 %v63
    %v186 = vpop.f32.mrf.mxu0
    %v187 = vadd.f32 %v44, %v186
    %v188 = vpop.f32.mrf.mxu0
    %189 = vmatprep.mubr.f32.mxu0 0.0
    %190 = vmatmul.mubr.f32.gmra.mxu0 %v66
    %v191 = vpop.f32.mrf.mxu0
    %v192 = vadd.f32 %v44, %v191
    %v193 = vpop.f32.mrf.mxu0
    %194 = vmatprep.mubr.f32.mxu0 0.0
    %195 = vmatmul.mubr.f32.gmra.mxu0 %v69
    %v196 = vpop.f32.mrf.mxu0
    %v197 = vadd.f32 %v44, %v196
    %v198 = vpop.f32.mrf.mxu0
    %199 = vmatprep.mubr.f32.mxu0 0.0
    %200 = vmatmul.mubr.f32.gmra.mxu0 %v72
    %v201 = vpop.f32.mrf.mxu0
    %v202 = vadd.f32 %v44, %v201
    %v203 = vpop.f32.mrf.mxu0
    %204 = vmatprep.mubr.f32.mxu0 0.0
    %205 = vmatmul.mubr.f32.gmra.mxu0 %v75
    %v206 = vpop.f32.mrf.mxu0
    %v207 = vadd.f32 %v44, %v206
    %v208 = vpop.f32.mrf.mxu0
    %209 = vmatprep.mubr.f32.mxu0 0.0
    %210 = vmatmul.mubr.f32.gmra.mxu0 %v78
    %v211 = vpop.f32.mrf.mxu0
    %v212 = vadd.f32 %v44, %v211
    %v213 = vpop.f32.mrf.mxu0
    %214 = vmatprep.mubr.f32.mxu0 0.0
    %215 = vmatmul.mubr.f32.gmra.mxu0 %v81
    %v216 = vpop.f32.mrf.mxu0
    %v217 = vadd.f32 %v44, %v216
    %v218 = vpop.f32.mrf.mxu0
    %219 = vmatprep.mubr.f32.mxu0 0.0
    %220 = vmatmul.mubr.f32.gmra.mxu0 %v84
    %v221 = vpop.f32.mrf.mxu0
    %v222 = vadd.f32 %v44, %v221
    %v223 = vpop.f32.mrf.mxu0
    %224 = vmatprep.mubr.f32.mxu0 0.0
    %225 = vmatmul.mubr.f32.gmra.mxu0 %v87
    %v226 = vpop.f32.mrf.mxu0
    %v227 = vadd.f32 %v44, %v226
    %v228 = vpop.f32.mrf.mxu0
    %229 = vmatprep.mubr.f32.mxu0 0.0
    %230 = vmatmul.mubr.f32.gmra.mxu0 %v90
    %v231 = vpop.f32.mrf.mxu0
    %v232 = vadd.f32 %v44, %v231
    %v233 = vpop.f32.mrf.mxu0
    %234 = vmatprep.mubr.f32.mxu0 0.0
    %235 = vmatmul.mubr.f32.gmra.mxu0 %v93
    %v236 = vpop.f32.mrf.mxu0
    %v237 = vadd.f32 %v44, %v236
    %v238 = vpop.f32.mrf.mxu0
    %239 = vdwg.mxu0
    %v240 = vmax.f32 %v162, 0.0
    %v241 = vmax.f32 %v167, 0.0
    %v242 = vmax.f32 %v172, 0.0
    %v243 = vmax.f32 %v177, 0.0
    %v244 = vmax.f32 %v182, 0.0
    %v245 = vmax.f32 %v187, 0.0
    %v246 = vmax.f32 %v192, 0.0
    %v247 = vmax.f32 %v197, 0.0
    %v248 = vmax.f32 %v202, 0.0
    %v249 = vmax.f32 %v207, 0.0
    %v250 = vmax.f32 %v212, 0.0
    %v251 = vmax.f32 %v217, 0.0
    %v252 = vmax.f32 %v222, 0.0
    %v253 = vmax.f32 %v227, 0.0
    %v254 = vmax.f32 %v232, 0.0
    %v255 = vmax.f32 %v237, 0.0
    %v256 = vld [vmem:[%s3] sm:$0xff]
    %v257 = vld [vmem:[%s3 + $0x8] sm:$0xff]
    %v258 = vld [vmem:[%s3 + $0x10] sm:$0xff]
    %v259 = vld [vmem:[%s3 + $0x18] sm:$0xff]
    %v260 = vld [vmem:[%s4] sm:$0x1]
    %v262 = vlaneseq
    %v263 = vshrl.u32 %v262, 7
    %v264 = vsub.s32 0, %v263
    %v265 = vrot.slane %v260, %v264
    %vm267 = vcmask 261120
    %v269 = vsel %vm267, %v240, 0
    %v272 = vsel %vm267, %v241, 0
    %v275 = vsel %vm267, %v242, 0
    %v278 = vsel %vm267, %v243, 0
    %v281 = vsel %vm267, %v244, 0
    %v284 = vsel %vm267, %v245, 0
    %v287 = vsel %vm267, %v246, 0
    %v290 = vsel %vm267, %v247, 0
    %v293 = vsel %vm267, %v248, 0
    %v296 = vsel %vm267, %v249, 0
    %v299 = vsel %vm267, %v250, 0
    %v302 = vsel %vm267, %v251, 0
    %v305 = vsel %vm267, %v252, 0
    %v308 = vsel %vm267, %v253, 0
    %v311 = vsel %vm267, %v254, 0
    %v314 = vsel %vm267, %v255, 0
    %316 = vmatprep.subr.mxu0 0.0
    %317 = vmatpush1.msra.mxu0 0.0
    %318 = vmatprep.subr.mxu0 0.0
    %319 = vmatpush1.msra.mxu0 0.0
    %320 = vmatprep.subr.mxu0 0.0
    %321 = vmatpush1.msra.mxu0 0.0
    %322 = vmatprep.subr.mxu0 0.0
    %323 = vmatpush1.msra.mxu0 0.0
    %324 = vmatprep.subr.mxu0 0.0
    %325 = vmatpush1.msra.mxu0 0.0
    %326 = vmatprep.subr.mxu0 0.0
    %327 = vmatpush1.msra.mxu0 0.0
    %328 = vmatprep.subr.mxu0 0.0
    %329 = vmatpush1.msra.mxu0 0.0
    %330 = vmatprep.subr.mxu0 0.0
    %331 = vmatpush1.msra.mxu0 0.0
    %332 = vmatprep.subr.mxu0 0.0
    %333 = vmatpush1.msra.mxu0 0.0
    %334 = vmatprep.subr.mxu0 0.0
    %335 = vmatpush1.msra.mxu0 0.0
    %336 = vmatprep.subr.mxu0 0.0
    %337 = vmatpush1.msra.mxu0 0.0
    %338 = vmatprep.subr.mxu0 0.0
    %339 = vmatpush1.msra.mxu0 0.0
    %340 = vmatprep.subr.mxu0 0.0
    %341 = vmatpush1.msra.mxu0 %v259
    %342 = vmatprep.subr.mxu0 0.0
    %343 = vmatpush1.msra.mxu0 %v258
    %344 = vmatprep.subr.mxu0 0.0
    %345 = vmatpush1.msra.mxu0 %v257
    %346 = vmatprep.subr.mxu0 0.0
    %347 = vmatpush1.msra.mxu0 %v256
    %348 = vmatprep.subr.mxu0 0.0
    %349 = vmatpush2.msra.mxu0 0.0
    %350 = vmatprep.subr.mxu0 0.0
    %351 = vmatpush2.msra.mxu0 0.0
    %352 = vmatprep.subr.mxu0 0.0
    %353 = vmatpush2.msra.mxu0 0.0
    %354 = vmatprep.subr.mxu0 0.0
    %355 = vmatpush2.msra.mxu0 0.0
    %356 = vmatprep.subr.mxu0 0.0
    %357 = vmatpush2.msra.mxu0 0.0
    %358 = vmatprep.subr.mxu0 0.0
    %359 = vmatpush2.msra.mxu0 0.0
    %360 = vmatprep.subr.mxu0 0.0
    %361 = vmatpush2.msra.mxu0 0.0
    %362 = vmatprep.subr.mxu0 0.0
    %363 = vmatpush2.msra.mxu0 0.0
    %364 = vmatprep.subr.mxu0 0.0
    %365 = vmatpush2.msra.mxu0 0.0
    %366 = vmatprep.subr.mxu0 0.0
    %367 = vmatpush2.msra.mxu0 0.0
    %368 = vmatprep.subr.mxu0 0.0
    %369 = vmatpush2.msra.mxu0 0.0
    %370 = vmatprep.subr.mxu0 0.0
    %371 = vmatpush2.msra.mxu0 0.0
    %372 = vmatprep.subr.mxu0 0.0
    %373 = vmatpush2.msra.mxu0 0.0
    %374 = vmatprep.subr.mxu0 0.0
    %375 = vmatpush2.msra.mxu0 0.0
    %376 = vmatprep.subr.mxu0 0.0
    %377 = vmatpush2.msra.mxu0 0.0
    %378 = vmatprep.subr.mxu0 0.0
    %379 = vmatpush2.msra.mxu0 0.0
    %380 = vmatprep.mubr.f32.mxu0 0.0
    %381 = vmatmul.mubr.f32.gmra.mxu0 %v269
    %v382 = vpop.f32.mrf.mxu0
    %v383 = vadd.f32 %v265, %v382
    %v384 = vpop.f32.mrf.mxu0
    %385 = vmatprep.mubr.f32.mxu0 0.0
    %386 = vmatmul.mubr.f32.gmra.mxu0 %v272
    %v387 = vpop.f32.mrf.mxu0
    %v388 = vadd.f32 %v265, %v387
    %v389 = vpop.f32.mrf.mxu0
    %390 = vmatprep.mubr.f32.mxu0 0.0
    %391 = vmatmul.mubr.f32.gmra.mxu0 %v275
    %v392 = vpop.f32.mrf.mxu0
    %v393 = vadd.f32 %v265, %v392
    %v394 = vpop.f32.mrf.mxu0
    %395 = vmatprep.mubr.f32.mxu0 0.0
    %396 = vmatmul.mubr.f32.gmra.mxu0 %v278
    %v397 = vpop.f32.mrf.mxu0
    %v398 = vadd.f32 %v265, %v397
    %v399 = vpop.f32.mrf.mxu0
    %400 = vmatprep.mubr.f32.mxu0 0.0
    %401 = vmatmul.mubr.f32.gmra.mxu0 %v281
    %v402 = vpop.f32.mrf.mxu0
    %v403 = vadd.f32 %v265, %v402
    %v404 = vpop.f32.mrf.mxu0
    %405 = vmatprep.mubr.f32.mxu0 0.0
    %406 = vmatmul.mubr.f32.gmra.mxu0 %v284
    %v407 = vpop.f32.mrf.mxu0
    %v408 = vadd.f32 %v265, %v407
    %v409 = vpop.f32.mrf.mxu0
    %410 = vmatprep.mubr.f32.mxu0 0.0
    %411 = vmatmul.mubr.f32.gmra.mxu0 %v287
    %v412 = vpop.f32.mrf.mxu0
    %v413 = vadd.f32 %v265, %v412
    %v414 = vpop.f32.mrf.mxu0
    %415 = vmatprep.mubr.f32.mxu0 0.0
    %416 = vmatmul.mubr.f32.gmra.mxu0 %v290
    %v417 = vpop.f32.mrf.mxu0
    %v418 = vadd.f32 %v265, %v417
    %v419 = vpop.f32.mrf.mxu0
    %420 = vmatprep.mubr.f32.mxu0 0.0
    %421 = vmatmul.mubr.f32.gmra.mxu0 %v293
    %v422 = vpop.f32.mrf.mxu0
    %v423 = vadd.f32 %v265, %v422
    %v424 = vpop.f32.mrf.mxu0
    %425 = vmatprep.mubr.f32.mxu0 0.0
    %426 = vmatmul.mubr.f32.gmra.mxu0 %v296
    %v427 = vpop.f32.mrf.mxu0
    %v428 = vadd.f32 %v265, %v427
    %v429 = vpop.f32.mrf.mxu0
    %430 = vmatprep.mubr.f32.mxu0 0.0
    %431 = vmatmul.mubr.f32.gmra.mxu0 %v299
    %v432 = vpop.f32.mrf.mxu0
    %v433 = vadd.f32 %v265, %v432
    %v434 = vpop.f32.mrf.mxu0
    %435 = vmatprep.mubr.f32.mxu0 0.0
    %436 = vmatmul.mubr.f32.gmra.mxu0 %v302
    %v437 = vpop.f32.mrf.mxu0
    %v438 = vadd.f32 %v265, %v437
    %v439 = vpop.f32.mrf.mxu0
    %440 = vmatprep.mubr.f32.mxu0 0.0
    %441 = vmatmul.mubr.f32.gmra.mxu0 %v305
    %v442 = vpop.f32.mrf.mxu0
    %v443 = vadd.f32 %v265, %v442
    %v444 = vpop.f32.mrf.mxu0
    %445 = vmatprep.mubr.f32.mxu0 0.0
    %446 = vmatmul.mubr.f32.gmra.mxu0 %v308
    %v447 = vpop.f32.mrf.mxu0
    %v448 = vadd.f32 %v265, %v447
    %v449 = vpop.f32.mrf.mxu0
    %450 = vmatprep.mubr.f32.mxu0 0.0
    %451 = vmatmul.mubr.f32.gmra.mxu0 %v311
    %v452 = vpop.f32.mrf.mxu0
    %v453 = vadd.f32 %v265, %v452
    %v454 = vpop.f32.mrf.mxu0
    %455 = vmatprep.mubr.f32.mxu0 0.0
    %456 = vmatmul.mubr.f32.gmra.mxu0 %v314
    %v457 = vpop.f32.mrf.mxu0
    %v458 = vadd.f32 %v265, %v457
    %v459 = vpop.f32.mrf.mxu0
    %460 = vdwg.mxu0
    %461 = vst [vmem:[#allocation2] sm:$0xff] %v383
    %462 = vst [vmem:[#allocation2 + $0x8] sm:$0xff] %v388
    %463 = vst [vmem:[#allocation2 + $0x10] sm:$0xff] %v393
    %464 = vst [vmem:[#allocation2 + $0x18] sm:$0xff] %v398
    %465 = vst [vmem:[#allocation2 + $0x20] sm:$0xff] %v403
    %466 = vst [vmem:[#allocation2 + $0x28] sm:$0xff] %v408
    %467 = vst [vmem:[#allocation2 + $0x30] sm:$0xff] %v413
    %468 = vst [vmem:[#allocation2 + $0x38] sm:$0xff] %v418
    %469 = vst [vmem:[#allocation2 + $0x40] sm:$0xff] %v423
    %470 = vst [vmem:[#allocation2 + $0x48] sm:$0xff] %v428
    %471 = vst [vmem:[#allocation2 + $0x50] sm:$0xff] %v433
    %472 = vst [vmem:[#allocation2 + $0x58] sm:$0xff] %v438
    %473 = vst [vmem:[#allocation2 + $0x60] sm:$0xff] %v443
    %474 = vst [vmem:[#allocation2 + $0x68] sm:$0xff] %v448
    %475 = vst [vmem:[#allocation2 + $0x70] sm:$0xff] %v453
    %476 = vst [vmem:[#allocation2 + $0x78] sm:$0xff] %v458
    // Predicated region
    $region22: #{tpu_custom_call.1} parent=1 // pred_check
      _
    $region23: #{tpu_custom_call.1} parent=1 // pred_check_branch
      %478 = sbr.rel (0) target = $region25
    $region24: #{tpu_custom_call.1} parent=1 // pred_region
      %s480 = ssub.s32 2048, 2048
      %481 = vsyncadd [#allocation3], %s480
      %s482 = sshll.u32 [#allocation2], 4
      %s483 = int_to_ptr.vmem [resolvable:$true] %s482
      %488 = dma.vmem_to_hbm [thread:$0]  %s483, 2048, %s5, [#allocation3], 128, 128, 8
    $region25: #{tpu_custom_call.1} parent=1 // pred_fallthru
      _
    // Predicated region
    $region26: #{tpu_custom_call.1} parent=1 // pred_check
      _
    $region27: #{tpu_custom_call.1} parent=1 // pred_check_branch
      %490 = sbr.rel (0) target = $region29
    $region28: #{tpu_custom_call.1} parent=1 // pred_region
      %491 = dma.done [#allocation3], 2048
    $region29: #{tpu_custom_call.1} parent=1 // pred_fallthru
      _
    %492 = vsyncpa [#allocation3], 1

</llo_original>
